<compile_context>
chip_gen: v7x
topology: tpu7x:2x2x1
jax: 0.10.0
libtpu: 0.0.40
codegen_flags: <defaults>
</compile_context>

<pallas_src>
import math
import jax
import jax.numpy as jnp
from jax.experimental import pallas as pl
from jax.experimental.pallas import tpu as pltpu

VOCAB = 1024
D_MODEL = 512
B, S = 2, 8
SCALE = math.sqrt(D_MODEL)


def _embedding_gather_kernel(ids_ref, table_hbm, o_ref, row_buf, sems):
    """Gather TT embedding rows straight from the HBM table, scale, store.

    ids_ref   : SMEM (T_padded,) int32   scalar-prefetched token ids
    table_hbm : HBM  (VOCAB, D)          raw ref (memory_space=pl.ANY)
    o_ref     : VMEM (TT, D)             output block for this token tile
    row_buf   : VMEM (TT, D)             gather scratch
    sems      : DMA semaphores, shape (TT,)
    """
    step = pl.program_id(0)
    tt = o_ref.shape[0]            # tokens per grid step (static)
    base = step * tt

    # Read all ids for this tile before any .wait() (keeps scalar reads cheap),
    # and issue every row DMA up front so they are all in flight concurrently.
    for i in range(tt):
        tok = ids_ref[base + i]
        pltpu.make_async_copy(table_hbm.at[tok], row_buf.at[i], sems.at[i]).start()

    # Wait for all row copies (src view only provides the byte count here).
    for i in range(tt):
        pltpu.make_async_copy(table_hbm.at[0], row_buf.at[i], sems.at[i]).wait()

    # Single lane-dense store; sqrt(d_model) is one VPU multiply over the block.
    o_ref[...] = row_buf[...] * SCALE


def embedding(ids, table, *, token_tile=128):
    """ids: int (B, S); table: float32 (VOCAB, D_MODEL). Returns (B, S, D_MODEL)."""
    b, s = ids.shape
    vocab, d_model = table.shape
    t = b * s
    ids_flat = ids.reshape(t).astype(jnp.int32)

    # Tokens per grid step: large enough to amortize the per-step overhead,
    # rounded up to a sublane multiple of 8.
    tt = min(token_tile, t)
    tt = max(8, ((tt + 7) // 8) * 8)
    t_pad = ((t + tt - 1) // tt) * tt
    if t_pad != t:
        ids_flat = jnp.concatenate(
            [ids_flat, jnp.zeros((t_pad - t,), jnp.int32)])
    num_tiles = t_pad // tt

    grid_spec = pltpu.PrefetchScalarGridSpec(
        num_scalar_prefetch=1,                      # ids -> SMEM
        grid=(num_tiles,),
        in_specs=[pl.BlockSpec(memory_space=pl.ANY)],   # table stays in HBM
        out_specs=pl.BlockSpec((tt, d_model), lambda i, ids: (i, 0)),
        scratch_shapes=[
            pltpu.VMEM((tt, d_model), table.dtype),     # gather buffer
            pltpu.SemaphoreType.DMA((tt,)),             # one sem per in-flight row
        ],
    )

    out = pl.pallas_call(
        _embedding_gather_kernel,
        out_shape=jax.ShapeDtypeStruct((t_pad, d_model), table.dtype),
        grid_spec=grid_spec,
        compiler_params=pltpu.CompilerParams(
            dimension_semantics=("parallel",)),         # token tiles are independent
    )(ids_flat, table)

    return out[:t].reshape(b, s, d_model)


if __name__ == "__main__":
    key = jax.random.PRNGKey(0)
    k_ids, k_tab = jax.random.split(key)

    ids = jax.random.randint(k_ids, (B, S), 0, VOCAB, dtype=jnp.int32)
    table = jax.random.normal(k_tab, (VOCAB, D_MODEL), jnp.float32)

    out = jax.block_until_ready(embedding(ids, table))

    # Pure-JAX reference: lut(x) * sqrt(d_model)
    ref = jax.block_until_ready(jnp.take(table, ids, axis=0) * SCALE)

    assert out.shape == (B, S, D_MODEL)
    assert bool(jnp.all(jnp.isfinite(out)))
    assert jnp.allclose(out, ref, rtol=1e-5, atol=1e-5), (
        float(jnp.max(jnp.abs(out - ref))))
    print("KERNEL_OK")
</pallas_src>

<mosaic_0001>
module attributes {stable_mosaic.version = 11 : i64} {
  func.func @_embedding_gather_kernel(%arg0: i32, %arg1: memref<16xi32, #tpu.memory_space<smem>>, %arg2: memref<1024x512xf32, #tpu.memory_space<any>>, %arg3: memref<16x512xf32, #tpu.memory_space<vmem>>, %arg4: memref<16x512xf32, #tpu.memory_space<vmem>>, %arg5: memref<16x!tpu.dma_semaphore, #tpu.memory_space<semaphore_mem>>) attributes {dimension_semantics = [#tpu.dimension_semantics<parallel>], iteration_bounds = array<i64: 1>, scalar_prefetch = 1 : i64, scratch_operands = 2 : i64, tpu.core_type = #tpu.core_type<tc>, window_params = [{}, {transform_indices = @transform_1, window_bounds = array<i64: 16, 512>}]} {
    %c16_i32 = arith.constant 16 : i32
    %0 = arith.muli %arg0, %c16_i32 : i32
    %c0_i32 = arith.constant 0 : i32
    %1 = arith.addi %0, %c0_i32 : i32
    %2 = arith.index_cast %1 : i32 to index
    %3 = memref.load %arg1[%2] : memref<16xi32, #tpu.memory_space<smem>>
    %c0_i32_0 = arith.constant 0 : i32
    %c0_i32_1 = arith.constant 0 : i32
    %c0_i32_2 = arith.constant 0 : i32
    %4 = tpu.memref_slice %arg2[%3, %c0_i32_2] : memref<1024x512xf32, #tpu.memory_space<any>> -> memref<1x512xf32, #tpu.memory_space<any>>
    %5 = tpu.memref_squeeze %4 : memref<1x512xf32, #tpu.memory_space<any>> -> memref<512xf32, #tpu.memory_space<any>>
    %c0_i32_3 = arith.constant 0 : i32
    %6 = tpu.memref_slice %arg4[%c0_i32_0, %c0_i32_3] : memref<16x512xf32, #tpu.memory_space<vmem>> -> memref<1x512xf32, #tpu.memory_space<vmem>>
    %7 = tpu.memref_squeeze %6 : memref<1x512xf32, #tpu.memory_space<vmem>> -> memref<512xf32, #tpu.memory_space<vmem>>
    %8 = tpu.memref_slice %arg5[%c0_i32_1] : memref<16x!tpu.dma_semaphore, #tpu.memory_space<semaphore_mem>> -> memref<1x!tpu.dma_semaphore, #tpu.memory_space<semaphore_mem>>
    %9 = tpu.memref_squeeze %8 : memref<1x!tpu.dma_semaphore, #tpu.memory_space<semaphore_mem>> -> memref<!tpu.dma_semaphore, #tpu.memory_space<semaphore_mem>>
    tpu.enqueue_dma source(%5 : memref<512xf32, #tpu.memory_space<any>>) target(%7 : memref<512xf32, #tpu.memory_space<vmem>>) target_semaphore(%9 : memref<!tpu.dma_semaphore, #tpu.memory_space<semaphore_mem>>)
    %c1_i32 = arith.constant 1 : i32
    %10 = arith.addi %0, %c1_i32 : i32
    %11 = arith.index_cast %10 : i32 to index
    %12 = memref.load %arg1[%11] : memref<16xi32, #tpu.memory_space<smem>>
    %c1_i32_4 = arith.constant 1 : i32
    %c1_i32_5 = arith.constant 1 : i32
    %c0_i32_6 = arith.constant 0 : i32
    %13 = tpu.memref_slice %arg2[%12, %c0_i32_6] : memref<1024x512xf32, #tpu.memory_space<any>> -> memref<1x512xf32, #tpu.memory_space<any>>
    %14 = tpu.memref_squeeze %13 : memref<1x512xf32, #tpu.memory_space<any>> -> memref<512xf32, #tpu.memory_space<any>>
    %c0_i32_7 = arith.constant 0 : i32
    %15 = tpu.memref_slice %arg4[%c1_i32_4, %c0_i32_7] : memref<16x512xf32, #tpu.memory_space<vmem>> -> memref<1x512xf32, #tpu.memory_space<vmem>>
    %16 = tpu.memref_squeeze %15 : memref<1x512xf32, #tpu.memory_space<vmem>> -> memref<512xf32, #tpu.memory_space<vmem>>
    %17 = tpu.memref_slice %arg5[%c1_i32_5] : memref<16x!tpu.dma_semaphore, #tpu.memory_space<semaphore_mem>> -> memref<1x!tpu.dma_semaphore, #tpu.memory_space<semaphore_mem>>
    %18 = tpu.memref_squeeze %17 : memref<1x!tpu.dma_semaphore, #tpu.memory_space<semaphore_mem>> -> memref<!tpu.dma_semaphore, #tpu.memory_space<semaphore_mem>>
    tpu.enqueue_dma source(%14 : memref<512xf32, #tpu.memory_space<any>>) target(%16 : memref<512xf32, #tpu.memory_space<vmem>>) target_semaphore(%18 : memref<!tpu.dma_semaphore, #tpu.memory_space<semaphore_mem>>)
    %c2_i32 = arith.constant 2 : i32
    %19 = arith.addi %0, %c2_i32 : i32
    %20 = arith.index_cast %19 : i32 to index
    %21 = memref.load %arg1[%20] : memref<16xi32, #tpu.memory_space<smem>>
    %c2_i32_8 = arith.constant 2 : i32
    %c2_i32_9 = arith.constant 2 : i32
    %c0_i32_10 = arith.constant 0 : i32
    %22 = tpu.memref_slice %arg2[%21, %c0_i32_10] : memref<1024x512xf32, #tpu.memory_space<any>> -> memref<1x512xf32, #tpu.memory_space<any>>
    %23 = tpu.memref_squeeze %22 : memref<1x512xf32, #tpu.memory_space<any>> -> memref<512xf32, #tpu.memory_space<any>>
    %c0_i32_11 = arith.constant 0 : i32
    %24 = tpu.memref_slice %arg4[%c2_i32_8, %c0_i32_11] : memref<16x512xf32, #tpu.memory_space<vmem>> -> memref<1x512xf32, #tpu.memory_space<vmem>>
    %25 = tpu.memref_squeeze %24 : memref<1x512xf32, #tpu.memory_space<vmem>> -> memref<512xf32, #tpu.memory_space<vmem>>
    %26 = tpu.memref_slice %arg5[%c2_i32_9] : memref<16x!tpu.dma_semaphore, #tpu.memory_space<semaphore_mem>> -> memref<1x!tpu.dma_semaphore, #tpu.memory_space<semaphore_mem>>
    %27 = tpu.memref_squeeze %26 : memref<1x!tpu.dma_semaphore, #tpu.memory_space<semaphore_mem>> -> memref<!tpu.dma_semaphore, #tpu.memory_space<semaphore_mem>>
    tpu.enqueue_dma source(%23 : memref<512xf32, #tpu.memory_space<any>>) target(%25 : memref<512xf32, #tpu.memory_space<vmem>>) target_semaphore(%27 : memref<!tpu.dma_semaphore, #tpu.memory_space<semaphore_mem>>)
    %c3_i32 = arith.constant 3 : i32
    %28 = arith.addi %0, %c3_i32 : i32
    %29 = arith.index_cast %28 : i32 to index
    %30 = memref.load %arg1[%29] : memref<16xi32, #tpu.memory_space<smem>>
    %c3_i32_12 = arith.constant 3 : i32
    %c3_i32_13 = arith.constant 3 : i32
    %c0_i32_14 = arith.constant 0 : i32
    %31 = tpu.memref_slice %arg2[%30, %c0_i32_14] : memref<1024x512xf32, #tpu.memory_space<any>> -> memref<1x512xf32, #tpu.memory_space<any>>
    %32 = tpu.memref_squeeze %31 : memref<1x512xf32, #tpu.memory_space<any>> -> memref<512xf32, #tpu.memory_space<any>>
    %c0_i32_15 = arith.constant 0 : i32
    %33 = tpu.memref_slice %arg4[%c3_i32_12, %c0_i32_15] : memref<16x512xf32, #tpu.memory_space<vmem>> -> memref<1x512xf32, #tpu.memory_space<vmem>>
    %34 = tpu.memref_squeeze %33 : memref<1x512xf32, #tpu.memory_space<vmem>> -> memref<512xf32, #tpu.memory_space<vmem>>
    %35 = tpu.memref_slice %arg5[%c3_i32_13] : memref<16x!tpu.dma_semaphore, #tpu.memory_space<semaphore_mem>> -> memref<1x!tpu.dma_semaphore, #tpu.memory_space<semaphore_mem>>
    %36 = tpu.memref_squeeze %35 : memref<1x!tpu.dma_semaphore, #tpu.memory_space<semaphore_mem>> -> memref<!tpu.dma_semaphore, #tpu.memory_space<semaphore_mem>>
    tpu.enqueue_dma source(%32 : memref<512xf32, #tpu.memory_space<any>>) target(%34 : memref<512xf32, #tpu.memory_space<vmem>>) target_semaphore(%36 : memref<!tpu.dma_semaphore, #tpu.memory_space<semaphore_mem>>)
    %c4_i32 = arith.constant 4 : i32
    %37 = arith.addi %0, %c4_i32 : i32
    %38 = arith.index_cast %37 : i32 to index
    %39 = memref.load %arg1[%38] : memref<16xi32, #tpu.memory_space<smem>>
    %c4_i32_16 = arith.constant 4 : i32
    %c4_i32_17 = arith.constant 4 : i32
    %c0_i32_18 = arith.constant 0 : i32
    %40 = tpu.memref_slice %arg2[%39, %c0_i32_18] : memref<1024x512xf32, #tpu.memory_space<any>> -> memref<1x512xf32, #tpu.memory_space<any>>
    %41 = tpu.memref_squeeze %40 : memref<1x512xf32, #tpu.memory_space<any>> -> memref<512xf32, #tpu.memory_space<any>>
    %c0_i32_19 = arith.constant 0 : i32
    %42 = tpu.memref_slice %arg4[%c4_i32_16, %c0_i32_19] : memref<16x512xf32, #tpu.memory_space<vmem>> -> memref<1x512xf32, #tpu.memory_space<vmem>>
    %43 = tpu.memref_squeeze %42 : memref<1x512xf32, #tpu.memory_space<vmem>> -> memref<512xf32, #tpu.memory_space<vmem>>
    %44 = tpu.memref_slice %arg5[%c4_i32_17] : memref<16x!tpu.dma_semaphore, #tpu.memory_space<semaphore_mem>> -> memref<1x!tpu.dma_semaphore, #tpu.memory_space<semaphore_mem>>
    %45 = tpu.memref_squeeze %44 : memref<1x!tpu.dma_semaphore, #tpu.memory_space<semaphore_mem>> -> memref<!tpu.dma_semaphore, #tpu.memory_space<semaphore_mem>>
    tpu.enqueue_dma source(%41 : memref<512xf32, #tpu.memory_space<any>>) target(%43 : memref<512xf32, #tpu.memory_space<vmem>>) target_semaphore(%45 : memref<!tpu.dma_semaphore, #tpu.memory_space<semaphore_mem>>)
    %c5_i32 = arith.constant 5 : i32
    %46 = arith.addi %0, %c5_i32 : i32
    %47 = arith.index_cast %46 : i32 to index
    %48 = memref.load %arg1[%47] : memref<16xi32, #tpu.memory_space<smem>>
    %c5_i32_20 = arith.constant 5 : i32
    %c5_i32_21 = arith.constant 5 : i32
    %c0_i32_22 = arith.constant 0 : i32
    %49 = tpu.memref_slice %arg2[%48, %c0_i32_22] : memref<1024x512xf32, #tpu.memory_space<any>> -> memref<1x512xf32, #tpu.memory_space<any>>
    %50 = tpu.memref_squeeze %49 : memref<1x512xf32, #tpu.memory_space<any>> -> memref<512xf32, #tpu.memory_space<any>>
    %c0_i32_23 = arith.constant 0 : i32
    %51 = tpu.memref_slice %arg4[%c5_i32_20, %c0_i32_23] : memref<16x512xf32, #tpu.memory_space<vmem>> -> memref<1x512xf32, #tpu.memory_space<vmem>>
    %52 = tpu.memref_squeeze %51 : memref<1x512xf32, #tpu.memory_space<vmem>> -> memref<512xf32, #tpu.memory_space<vmem>>
    %53 = tpu.memref_slice %arg5[%c5_i32_21] : memref<16x!tpu.dma_semaphore, #tpu.memory_space<semaphore_mem>> -> memref<1x!tpu.dma_semaphore, #tpu.memory_space<semaphore_mem>>
    %54 = tpu.memref_squeeze %53 : memref<1x!tpu.dma_semaphore, #tpu.memory_space<semaphore_mem>> -> memref<!tpu.dma_semaphore, #tpu.memory_space<semaphore_mem>>
    tpu.enqueue_dma source(%50 : memref<512xf32, #tpu.memory_space<any>>) target(%52 : memref<512xf32, #tpu.memory_space<vmem>>) target_semaphore(%54 : memref<!tpu.dma_semaphore, #tpu.memory_space<semaphore_mem>>)
    %c6_i32 = arith.constant 6 : i32
    %55 = arith.addi %0, %c6_i32 : i32
    %56 = arith.index_cast %55 : i32 to index
    %57 = memref.load %arg1[%56] : memref<16xi32, #tpu.memory_space<smem>>
    %c6_i32_24 = arith.constant 6 : i32
    %c6_i32_25 = arith.constant 6 : i32
    %c0_i32_26 = arith.constant 0 : i32
    %58 = tpu.memref_slice %arg2[%57, %c0_i32_26] : memref<1024x512xf32, #tpu.memory_space<any>> -> memref<1x512xf32, #tpu.memory_space<any>>
    %59 = tpu.memref_squeeze %58 : memref<1x512xf32, #tpu.memory_space<any>> -> memref<512xf32, #tpu.memory_space<any>>
    %c0_i32_27 = arith.constant 0 : i32
    %60 = tpu.memref_slice %arg4[%c6_i32_24, %c0_i32_27] : memref<16x512xf32, #tpu.memory_space<vmem>> -> memref<1x512xf32, #tpu.memory_space<vmem>>
    %61 = tpu.memref_squeeze %60 : memref<1x512xf32, #tpu.memory_space<vmem>> -> memref<512xf32, #tpu.memory_space<vmem>>
    %62 = tpu.memref_slice %arg5[%c6_i32_25] : memref<16x!tpu.dma_semaphore, #tpu.memory_space<semaphore_mem>> -> memref<1x!tpu.dma_semaphore, #tpu.memory_space<semaphore_mem>>
    %63 = tpu.memref_squeeze %62 : memref<1x!tpu.dma_semaphore, #tpu.memory_space<semaphore_mem>> -> memref<!tpu.dma_semaphore, #tpu.memory_space<semaphore_mem>>
    tpu.enqueue_dma source(%59 : memref<512xf32, #tpu.memory_space<any>>) target(%61 : memref<512xf32, #tpu.memory_space<vmem>>) target_semaphore(%63 : memref<!tpu.dma_semaphore, #tpu.memory_space<semaphore_mem>>)
    %c7_i32 = arith.constant 7 : i32
    %64 = arith.addi %0, %c7_i32 : i32
    %65 = arith.index_cast %64 : i32 to index
    %66 = memref.load %arg1[%65] : memref<16xi32, #tpu.memory_space<smem>>
    %c7_i32_28 = arith.constant 7 : i32
    %c7_i32_29 = arith.constant 7 : i32
    %c0_i32_30 = arith.constant 0 : i32
    %67 = tpu.memref_slice %arg2[%66, %c0_i32_30] : memref<1024x512xf32, #tpu.memory_space<any>> -> memref<1x512xf32, #tpu.memory_space<any>>
    %68 = tpu.memref_squeeze %67 : memref<1x512xf32, #tpu.memory_space<any>> -> memref<512xf32, #tpu.memory_space<any>>
    %c0_i32_31 = arith.constant 0 : i32
    %69 = tpu.memref_slice %arg4[%c7_i32_28, %c0_i32_31] : memref<16x512xf32, #tpu.memory_space<vmem>> -> memref<1x512xf32, #tpu.memory_space<vmem>>
    %70 = tpu.memref_squeeze %69 : memref<1x512xf32, #tpu.memory_space<vmem>> -> memref<512xf32, #tpu.memory_space<vmem>>
    %71 = tpu.memref_slice %arg5[%c7_i32_29] : memref<16x!tpu.dma_semaphore, #tpu.memory_space<semaphore_mem>> -> memref<1x!tpu.dma_semaphore, #tpu.memory_space<semaphore_mem>>
    %72 = tpu.memref_squeeze %71 : memref<1x!tpu.dma_semaphore, #tpu.memory_space<semaphore_mem>> -> memref<!tpu.dma_semaphore, #tpu.memory_space<semaphore_mem>>
    tpu.enqueue_dma source(%68 : memref<512xf32, #tpu.memory_space<any>>) target(%70 : memref<512xf32, #tpu.memory_space<vmem>>) target_semaphore(%72 : memref<!tpu.dma_semaphore, #tpu.memory_space<semaphore_mem>>)
    %c8_i32 = arith.constant 8 : i32
    %73 = arith.addi %0, %c8_i32 : i32
    %74 = arith.index_cast %73 : i32 to index
    %75 = memref.load %arg1[%74] : memref<16xi32, #tpu.memory_space<smem>>
    %c8_i32_32 = arith.constant 8 : i32
    %c8_i32_33 = arith.constant 8 : i32
    %c0_i32_34 = arith.constant 0 : i32
    %76 = tpu.memref_slice %arg2[%75, %c0_i32_34] : memref<1024x512xf32, #tpu.memory_space<any>> -> memref<1x512xf32, #tpu.memory_space<any>>
    %77 = tpu.memref_squeeze %76 : memref<1x512xf32, #tpu.memory_space<any>> -> memref<512xf32, #tpu.memory_space<any>>
    %c0_i32_35 = arith.constant 0 : i32
    %78 = tpu.memref_slice %arg4[%c8_i32_32, %c0_i32_35] : memref<16x512xf32, #tpu.memory_space<vmem>> -> memref<1x512xf32, #tpu.memory_space<vmem>>
    %79 = tpu.memref_squeeze %78 : memref<1x512xf32, #tpu.memory_space<vmem>> -> memref<512xf32, #tpu.memory_space<vmem>>
    %80 = tpu.memref_slice %arg5[%c8_i32_33] : memref<16x!tpu.dma_semaphore, #tpu.memory_space<semaphore_mem>> -> memref<1x!tpu.dma_semaphore, #tpu.memory_space<semaphore_mem>>
    %81 = tpu.memref_squeeze %80 : memref<1x!tpu.dma_semaphore, #tpu.memory_space<semaphore_mem>> -> memref<!tpu.dma_semaphore, #tpu.memory_space<semaphore_mem>>
    tpu.enqueue_dma source(%77 : memref<512xf32, #tpu.memory_space<any>>) target(%79 : memref<512xf32, #tpu.memory_space<vmem>>) target_semaphore(%81 : memref<!tpu.dma_semaphore, #tpu.memory_space<semaphore_mem>>)
    %c9_i32 = arith.constant 9 : i32
    %82 = arith.addi %0, %c9_i32 : i32
    %83 = arith.index_cast %82 : i32 to index
    %84 = memref.load %arg1[%83] : memref<16xi32, #tpu.memory_space<smem>>
    %c9_i32_36 = arith.constant 9 : i32
    %c9_i32_37 = arith.constant 9 : i32
    %c0_i32_38 = arith.constant 0 : i32
    %85 = tpu.memref_slice %arg2[%84, %c0_i32_38] : memref<1024x512xf32, #tpu.memory_space<any>> -> memref<1x512xf32, #tpu.memory_space<any>>
    %86 = tpu.memref_squeeze %85 : memref<1x512xf32, #tpu.memory_space<any>> -> memref<512xf32, #tpu.memory_space<any>>
    %c0_i32_39 = arith.constant 0 : i32
    %87 = tpu.memref_slice %arg4[%c9_i32_36, %c0_i32_39] : memref<16x512xf32, #tpu.memory_space<vmem>> -> memref<1x512xf32, #tpu.memory_space<vmem>>
    %88 = tpu.memref_squeeze %87 : memref<1x512xf32, #tpu.memory_space<vmem>> -> memref<512xf32, #tpu.memory_space<vmem>>
    %89 = tpu.memref_slice %arg5[%c9_i32_37] : memref<16x!tpu.dma_semaphore, #tpu.memory_space<semaphore_mem>> -> memref<1x!tpu.dma_semaphore, #tpu.memory_space<semaphore_mem>>
    %90 = tpu.memref_squeeze %89 : memref<1x!tpu.dma_semaphore, #tpu.memory_space<semaphore_mem>> -> memref<!tpu.dma_semaphore, #tpu.memory_space<semaphore_mem>>
    tpu.enqueue_dma source(%86 : memref<512xf32, #tpu.memory_space<any>>) target(%88 : memref<512xf32, #tpu.memory_space<vmem>>) target_semaphore(%90 : memref<!tpu.dma_semaphore, #tpu.memory_space<semaphore_mem>>)
    %c10_i32 = arith.constant 10 : i32
    %91 = arith.addi %0, %c10_i32 : i32
    %92 = arith.index_cast %91 : i32 to index
    %93 = memref.load %arg1[%92] : memref<16xi32, #tpu.memory_space<smem>>
    %c10_i32_40 = arith.constant 10 : i32
    %c10_i32_41 = arith.constant 10 : i32
    %c0_i32_42 = arith.constant 0 : i32
    %94 = tpu.memref_slice %arg2[%93, %c0_i32_42] : memref<1024x512xf32, #tpu.memory_space<any>> -> memref<1x512xf32, #tpu.memory_space<any>>
    %95 = tpu.memref_squeeze %94 : memref<1x512xf32, #tpu.memory_space<any>> -> memref<512xf32, #tpu.memory_space<any>>
    %c0_i32_43 = arith.constant 0 : i32
    %96 = tpu.memref_slice %arg4[%c10_i32_40, %c0_i32_43] : memref<16x512xf32, #tpu.memory_space<vmem>> -> memref<1x512xf32, #tpu.memory_space<vmem>>
    %97 = tpu.memref_squeeze %96 : memref<1x512xf32, #tpu.memory_space<vmem>> -> memref<512xf32, #tpu.memory_space<vmem>>
    %98 = tpu.memref_slice %arg5[%c10_i32_41] : memref<16x!tpu.dma_semaphore, #tpu.memory_space<semaphore_mem>> -> memref<1x!tpu.dma_semaphore, #tpu.memory_space<semaphore_mem>>
    %99 = tpu.memref_squeeze %98 : memref<1x!tpu.dma_semaphore, #tpu.memory_space<semaphore_mem>> -> memref<!tpu.dma_semaphore, #tpu.memory_space<semaphore_mem>>
    tpu.enqueue_dma source(%95 : memref<512xf32, #tpu.memory_space<any>>) target(%97 : memref<512xf32, #tpu.memory_space<vmem>>) target_semaphore(%99 : memref<!tpu.dma_semaphore, #tpu.memory_space<semaphore_mem>>)
    %c11_i32 = arith.constant 11 : i32
    %100 = arith.addi %0, %c11_i32 : i32
    %101 = arith.index_cast %100 : i32 to index
    %102 = memref.load %arg1[%101] : memref<16xi32, #tpu.memory_space<smem>>
    %c11_i32_44 = arith.constant 11 : i32
    %c11_i32_45 = arith.constant 11 : i32
    %c0_i32_46 = arith.constant 0 : i32
    %103 = tpu.memref_slice %arg2[%102, %c0_i32_46] : memref<1024x512xf32, #tpu.memory_space<any>> -> memref<1x512xf32, #tpu.memory_space<any>>
    %104 = tpu.memref_squeeze %103 : memref<1x512xf32, #tpu.memory_space<any>> -> memref<512xf32, #tpu.memory_space<any>>
    %c0_i32_47 = arith.constant 0 : i32
    %105 = tpu.memref_slice %arg4[%c11_i32_44, %c0_i32_47] : memref<16x512xf32, #tpu.memory_space<vmem>> -> memref<1x512xf32, #tpu.memory_space<vmem>>
    %106 = tpu.memref_squeeze %105 : memref<1x512xf32, #tpu.memory_space<vmem>> -> memref<512xf32, #tpu.memory_space<vmem>>
    %107 = tpu.memref_slice %arg5[%c11_i32_45] : memref<16x!tpu.dma_semaphore, #tpu.memory_space<semaphore_mem>> -> memref<1x!tpu.dma_semaphore, #tpu.memory_space<semaphore_mem>>
    %108 = tpu.memref_squeeze %107 : memref<1x!tpu.dma_semaphore, #tpu.memory_space<semaphore_mem>> -> memref<!tpu.dma_semaphore, #tpu.memory_space<semaphore_mem>>
    tpu.enqueue_dma source(%104 : memref<512xf32, #tpu.memory_space<any>>) target(%106 : memref<512xf32, #tpu.memory_space<vmem>>) target_semaphore(%108 : memref<!tpu.dma_semaphore, #tpu.memory_space<semaphore_mem>>)
    %c12_i32 = arith.constant 12 : i32
    %109 = arith.addi %0, %c12_i32 : i32
    %110 = arith.index_cast %109 : i32 to index
    %111 = memref.load %arg1[%110] : memref<16xi32, #tpu.memory_space<smem>>
    %c12_i32_48 = arith.constant 12 : i32
    %c12_i32_49 = arith.constant 12 : i32
    %c0_i32_50 = arith.constant 0 : i32
    %112 = tpu.memref_slice %arg2[%111, %c0_i32_50] : memref<1024x512xf32, #tpu.memory_space<any>> -> memref<1x512xf32, #tpu.memory_space<any>>
    %113 = tpu.memref_squeeze %112 : memref<1x512xf32, #tpu.memory_space<any>> -> memref<512xf32, #tpu.memory_space<any>>
    %c0_i32_51 = arith.constant 0 : i32
    %114 = tpu.memref_slice %arg4[%c12_i32_48, %c0_i32_51] : memref<16x512xf32, #tpu.memory_space<vmem>> -> memref<1x512xf32, #tpu.memory_space<vmem>>
    %115 = tpu.memref_squeeze %114 : memref<1x512xf32, #tpu.memory_space<vmem>> -> memref<512xf32, #tpu.memory_space<vmem>>
    %116 = tpu.memref_slice %arg5[%c12_i32_49] : memref<16x!tpu.dma_semaphore, #tpu.memory_space<semaphore_mem>> -> memref<1x!tpu.dma_semaphore, #tpu.memory_space<semaphore_mem>>
    %117 = tpu.memref_squeeze %116 : memref<1x!tpu.dma_semaphore, #tpu.memory_space<semaphore_mem>> -> memref<!tpu.dma_semaphore, #tpu.memory_space<semaphore_mem>>
    tpu.enqueue_dma source(%113 : memref<512xf32, #tpu.memory_space<any>>) target(%115 : memref<512xf32, #tpu.memory_space<vmem>>) target_semaphore(%117 : memref<!tpu.dma_semaphore, #tpu.memory_space<semaphore_mem>>)
    %c13_i32 = arith.constant 13 : i32
    %118 = arith.addi %0, %c13_i32 : i32
    %119 = arith.index_cast %118 : i32 to index
    %120 = memref.load %arg1[%119] : memref<16xi32, #tpu.memory_space<smem>>
    %c13_i32_52 = arith.constant 13 : i32
    %c13_i32_53 = arith.constant 13 : i32
    %c0_i32_54 = arith.constant 0 : i32
    %121 = tpu.memref_slice %arg2[%120, %c0_i32_54] : memref<1024x512xf32, #tpu.memory_space<any>> -> memref<1x512xf32, #tpu.memory_space<any>>
    %122 = tpu.memref_squeeze %121 : memref<1x512xf32, #tpu.memory_space<any>> -> memref<512xf32, #tpu.memory_space<any>>
    %c0_i32_55 = arith.constant 0 : i32
    %123 = tpu.memref_slice %arg4[%c13_i32_52, %c0_i32_55] : memref<16x512xf32, #tpu.memory_space<vmem>> -> memref<1x512xf32, #tpu.memory_space<vmem>>
    %124 = tpu.memref_squeeze %123 : memref<1x512xf32, #tpu.memory_space<vmem>> -> memref<512xf32, #tpu.memory_space<vmem>>
    %125 = tpu.memref_slice %arg5[%c13_i32_53] : memref<16x!tpu.dma_semaphore, #tpu.memory_space<semaphore_mem>> -> memref<1x!tpu.dma_semaphore, #tpu.memory_space<semaphore_mem>>
    %126 = tpu.memref_squeeze %125 : memref<1x!tpu.dma_semaphore, #tpu.memory_space<semaphore_mem>> -> memref<!tpu.dma_semaphore, #tpu.memory_space<semaphore_mem>>
    tpu.enqueue_dma source(%122 : memref<512xf32, #tpu.memory_space<any>>) target(%124 : memref<512xf32, #tpu.memory_space<vmem>>) target_semaphore(%126 : memref<!tpu.dma_semaphore, #tpu.memory_space<semaphore_mem>>)
    %c14_i32 = arith.constant 14 : i32
    %127 = arith.addi %0, %c14_i32 : i32
    %128 = arith.index_cast %127 : i32 to index
    %129 = memref.load %arg1[%128] : memref<16xi32, #tpu.memory_space<smem>>
    %c14_i32_56 = arith.constant 14 : i32
    %c14_i32_57 = arith.constant 14 : i32
    %c0_i32_58 = arith.constant 0 : i32
    %130 = tpu.memref_slice %arg2[%129, %c0_i32_58] : memref<1024x512xf32, #tpu.memory_space<any>> -> memref<1x512xf32, #tpu.memory_space<any>>
    %131 = tpu.memref_squeeze %130 : memref<1x512xf32, #tpu.memory_space<any>> -> memref<512xf32, #tpu.memory_space<any>>
    %c0_i32_59 = arith.constant 0 : i32
    %132 = tpu.memref_slice %arg4[%c14_i32_56, %c0_i32_59] : memref<16x512xf32, #tpu.memory_space<vmem>> -> memref<1x512xf32, #tpu.memory_space<vmem>>
    %133 = tpu.memref_squeeze %132 : memref<1x512xf32, #tpu.memory_space<vmem>> -> memref<512xf32, #tpu.memory_space<vmem>>
    %134 = tpu.memref_slice %arg5[%c14_i32_57] : memref<16x!tpu.dma_semaphore, #tpu.memory_space<semaphore_mem>> -> memref<1x!tpu.dma_semaphore, #tpu.memory_space<semaphore_mem>>
    %135 = tpu.memref_squeeze %134 : memref<1x!tpu.dma_semaphore, #tpu.memory_space<semaphore_mem>> -> memref<!tpu.dma_semaphore, #tpu.memory_space<semaphore_mem>>
    tpu.enqueue_dma source(%131 : memref<512xf32, #tpu.memory_space<any>>) target(%133 : memref<512xf32, #tpu.memory_space<vmem>>) target_semaphore(%135 : memref<!tpu.dma_semaphore, #tpu.memory_space<semaphore_mem>>)
    %c15_i32 = arith.constant 15 : i32
    %136 = arith.addi %0, %c15_i32 : i32
    %137 = arith.index_cast %136 : i32 to index
    %138 = memref.load %arg1[%137] : memref<16xi32, #tpu.memory_space<smem>>
    %c15_i32_60 = arith.constant 15 : i32
    %c15_i32_61 = arith.constant 15 : i32
    %c0_i32_62 = arith.constant 0 : i32
    %139 = tpu.memref_slice %arg2[%138, %c0_i32_62] : memref<1024x512xf32, #tpu.memory_space<any>> -> memref<1x512xf32, #tpu.memory_space<any>>
    %140 = tpu.memref_squeeze %139 : memref<1x512xf32, #tpu.memory_space<any>> -> memref<512xf32, #tpu.memory_space<any>>
    %c0_i32_63 = arith.constant 0 : i32
    %141 = tpu.memref_slice %arg4[%c15_i32_60, %c0_i32_63] : memref<16x512xf32, #tpu.memory_space<vmem>> -> memref<1x512xf32, #tpu.memory_space<vmem>>
    %142 = tpu.memref_squeeze %141 : memref<1x512xf32, #tpu.memory_space<vmem>> -> memref<512xf32, #tpu.memory_space<vmem>>
    %143 = tpu.memref_slice %arg5[%c15_i32_61] : memref<16x!tpu.dma_semaphore, #tpu.memory_space<semaphore_mem>> -> memref<1x!tpu.dma_semaphore, #tpu.memory_space<semaphore_mem>>
    %144 = tpu.memref_squeeze %143 : memref<1x!tpu.dma_semaphore, #tpu.memory_space<semaphore_mem>> -> memref<!tpu.dma_semaphore, #tpu.memory_space<semaphore_mem>>
    tpu.enqueue_dma source(%140 : memref<512xf32, #tpu.memory_space<any>>) target(%142 : memref<512xf32, #tpu.memory_space<vmem>>) target_semaphore(%144 : memref<!tpu.dma_semaphore, #tpu.memory_space<semaphore_mem>>)
    %c0_i32_64 = arith.constant 0 : i32
    %c0_i32_65 = arith.constant 0 : i32
    %c0_i32_66 = arith.constant 0 : i32
    %c0_i32_67 = arith.constant 0 : i32
    %145 = tpu.memref_slice %arg2[%c0_i32_64, %c0_i32_67] : memref<1024x512xf32, #tpu.memory_space<any>> -> memref<1x512xf32, #tpu.memory_space<any>>
    %146 = tpu.memref_squeeze %145 : memref<1x512xf32, #tpu.memory_space<any>> -> memref<512xf32, #tpu.memory_space<any>>
    %c0_i32_68 = arith.constant 0 : i32
    %147 = tpu.memref_slice %arg4[%c0_i32_65, %c0_i32_68] : memref<16x512xf32, #tpu.memory_space<vmem>> -> memref<1x512xf32, #tpu.memory_space<vmem>>
    %148 = tpu.memref_squeeze %147 : memref<1x512xf32, #tpu.memory_space<vmem>> -> memref<512xf32, #tpu.memory_space<vmem>>
    %149 = tpu.memref_slice %arg5[%c0_i32_66] : memref<16x!tpu.dma_semaphore, #tpu.memory_space<semaphore_mem>> -> memref<1x!tpu.dma_semaphore, #tpu.memory_space<semaphore_mem>>
    %150 = tpu.memref_squeeze %149 : memref<1x!tpu.dma_semaphore, #tpu.memory_space<semaphore_mem>> -> memref<!tpu.dma_semaphore, #tpu.memory_space<semaphore_mem>>
    tpu.wait_dma2 semaphore(%150 : memref<!tpu.dma_semaphore, #tpu.memory_space<semaphore_mem>>) src(%146 : memref<512xf32, #tpu.memory_space<any>>) dst(%148 : memref<512xf32, #tpu.memory_space<vmem>>)
    %c0_i32_69 = arith.constant 0 : i32
    %c1_i32_70 = arith.constant 1 : i32
    %c1_i32_71 = arith.constant 1 : i32
    %c0_i32_72 = arith.constant 0 : i32
    %151 = tpu.memref_slice %arg2[%c0_i32_69, %c0_i32_72] : memref<1024x512xf32, #tpu.memory_space<any>> -> memref<1x512xf32, #tpu.memory_space<any>>
    %152 = tpu.memref_squeeze %151 : memref<1x512xf32, #tpu.memory_space<any>> -> memref<512xf32, #tpu.memory_space<any>>
    %c0_i32_73 = arith.constant 0 : i32
    %153 = tpu.memref_slice %arg4[%c1_i32_70, %c0_i32_73] : memref<16x512xf32, #tpu.memory_space<vmem>> -> memref<1x512xf32, #tpu.memory_space<vmem>>
    %154 = tpu.memref_squeeze %153 : memref<1x512xf32, #tpu.memory_space<vmem>> -> memref<512xf32, #tpu.memory_space<vmem>>
    %155 = tpu.memref_slice %arg5[%c1_i32_71] : memref<16x!tpu.dma_semaphore, #tpu.memory_space<semaphore_mem>> -> memref<1x!tpu.dma_semaphore, #tpu.memory_space<semaphore_mem>>
    %156 = tpu.memref_squeeze %155 : memref<1x!tpu.dma_semaphore, #tpu.memory_space<semaphore_mem>> -> memref<!tpu.dma_semaphore, #tpu.memory_space<semaphore_mem>>
    tpu.wait_dma2 semaphore(%156 : memref<!tpu.dma_semaphore, #tpu.memory_space<semaphore_mem>>) src(%152 : memref<512xf32, #tpu.memory_space<any>>) dst(%154 : memref<512xf32, #tpu.memory_space<vmem>>)
    %c0_i32_74 = arith.constant 0 : i32
    %c2_i32_75 = arith.constant 2 : i32
    %c2_i32_76 = arith.constant 2 : i32
    %c0_i32_77 = arith.constant 0 : i32
    %157 = tpu.memref_slice %arg2[%c0_i32_74, %c0_i32_77] : memref<1024x512xf32, #tpu.memory_space<any>> -> memref<1x512xf32, #tpu.memory_space<any>>
    %158 = tpu.memref_squeeze %157 : memref<1x512xf32, #tpu.memory_space<any>> -> memref<512xf32, #tpu.memory_space<any>>
    %c0_i32_78 = arith.constant 0 : i32
    %159 = tpu.memref_slice %arg4[%c2_i32_75, %c0_i32_78] : memref<16x512xf32, #tpu.memory_space<vmem>> -> memref<1x512xf32, #tpu.memory_space<vmem>>
    %160 = tpu.memref_squeeze %159 : memref<1x512xf32, #tpu.memory_space<vmem>> -> memref<512xf32, #tpu.memory_space<vmem>>
    %161 = tpu.memref_slice %arg5[%c2_i32_76] : memref<16x!tpu.dma_semaphore, #tpu.memory_space<semaphore_mem>> -> memref<1x!tpu.dma_semaphore, #tpu.memory_space<semaphore_mem>>
    %162 = tpu.memref_squeeze %161 : memref<1x!tpu.dma_semaphore, #tpu.memory_space<semaphore_mem>> -> memref<!tpu.dma_semaphore, #tpu.memory_space<semaphore_mem>>
    tpu.wait_dma2 semaphore(%162 : memref<!tpu.dma_semaphore, #tpu.memory_space<semaphore_mem>>) src(%158 : memref<512xf32, #tpu.memory_space<any>>) dst(%160 : memref<512xf32, #tpu.memory_space<vmem>>)
    %c0_i32_79 = arith.constant 0 : i32
    %c3_i32_80 = arith.constant 3 : i32
    %c3_i32_81 = arith.constant 3 : i32
    %c0_i32_82 = arith.constant 0 : i32
    %163 = tpu.memref_slice %arg2[%c0_i32_79, %c0_i32_82] : memref<1024x512xf32, #tpu.memory_space<any>> -> memref<1x512xf32, #tpu.memory_space<any>>
    %164 = tpu.memref_squeeze %163 : memref<1x512xf32, #tpu.memory_space<any>> -> memref<512xf32, #tpu.memory_space<any>>
    %c0_i32_83 = arith.constant 0 : i32
    %165 = tpu.memref_slice %arg4[%c3_i32_80, %c0_i32_83] : memref<16x512xf32, #tpu.memory_space<vmem>> -> memref<1x512xf32, #tpu.memory_space<vmem>>
    %166 = tpu.memref_squeeze %165 : memref<1x512xf32, #tpu.memory_space<vmem>> -> memref<512xf32, #tpu.memory_space<vmem>>
    %167 = tpu.memref_slice %arg5[%c3_i32_81] : memref<16x!tpu.dma_semaphore, #tpu.memory_space<semaphore_mem>> -> memref<1x!tpu.dma_semaphore, #tpu.memory_space<semaphore_mem>>
    %168 = tpu.memref_squeeze %167 : memref<1x!tpu.dma_semaphore, #tpu.memory_space<semaphore_mem>> -> memref<!tpu.dma_semaphore, #tpu.memory_space<semaphore_mem>>
    tpu.wait_dma2 semaphore(%168 : memref<!tpu.dma_semaphore, #tpu.memory_space<semaphore_mem>>) src(%164 : memref<512xf32, #tpu.memory_space<any>>) dst(%166 : memref<512xf32, #tpu.memory_space<vmem>>)
    %c0_i32_84 = arith.constant 0 : i32
    %c4_i32_85 = arith.constant 4 : i32
    %c4_i32_86 = arith.constant 4 : i32
    %c0_i32_87 = arith.constant 0 : i32
    %169 = tpu.memref_slice %arg2[%c0_i32_84, %c0_i32_87] : memref<1024x512xf32, #tpu.memory_space<any>> -> memref<1x512xf32, #tpu.memory_space<any>>
    %170 = tpu.memref_squeeze %169 : memref<1x512xf32, #tpu.memory_space<any>> -> memref<512xf32, #tpu.memory_space<any>>
    %c0_i32_88 = arith.constant 0 : i32
    %171 = tpu.memref_slice %arg4[%c4_i32_85, %c0_i32_88] : memref<16x512xf32, #tpu.memory_space<vmem>> -> memref<1x512xf32, #tpu.memory_space<vmem>>
    %172 = tpu.memref_squeeze %171 : memref<1x512xf32, #tpu.memory_space<vmem>> -> memref<512xf32, #tpu.memory_space<vmem>>
    %173 = tpu.memref_slice %arg5[%c4_i32_86] : memref<16x!tpu.dma_semaphore, #tpu.memory_space<semaphore_mem>> -> memref<1x!tpu.dma_semaphore, #tpu.memory_space<semaphore_mem>>
    %174 = tpu.memref_squeeze %173 : memref<1x!tpu.dma_semaphore, #tpu.memory_space<semaphore_mem>> -> memref<!tpu.dma_semaphore, #tpu.memory_space<semaphore_mem>>
    tpu.wait_dma2 semaphore(%174 : memref<!tpu.dma_semaphore, #tpu.memory_space<semaphore_mem>>) src(%170 : memref<512xf32, #tpu.memory_space<any>>) dst(%172 : memref<512xf32, #tpu.memory_space<vmem>>)
    %c0_i32_89 = arith.constant 0 : i32
    %c5_i32_90 = arith.constant 5 : i32
    %c5_i32_91 = arith.constant 5 : i32
    %c0_i32_92 = arith.constant 0 : i32
    %175 = tpu.memref_slice %arg2[%c0_i32_89, %c0_i32_92] : memref<1024x512xf32, #tpu.memory_space<any>> -> memref<1x512xf32, #tpu.memory_space<any>>
    %176 = tpu.memref_squeeze %175 : memref<1x512xf32, #tpu.memory_space<any>> -> memref<512xf32, #tpu.memory_space<any>>
    %c0_i32_93 = arith.constant 0 : i32
    %177 = tpu.memref_slice %arg4[%c5_i32_90, %c0_i32_93] : memref<16x512xf32, #tpu.memory_space<vmem>> -> memref<1x512xf32, #tpu.memory_space<vmem>>
    %178 = tpu.memref_squeeze %177 : memref<1x512xf32, #tpu.memory_space<vmem>> -> memref<512xf32, #tpu.memory_space<vmem>>
    %179 = tpu.memref_slice %arg5[%c5_i32_91] : memref<16x!tpu.dma_semaphore, #tpu.memory_space<semaphore_mem>> -> memref<1x!tpu.dma_semaphore, #tpu.memory_space<semaphore_mem>>
    %180 = tpu.memref_squeeze %179 : memref<1x!tpu.dma_semaphore, #tpu.memory_space<semaphore_mem>> -> memref<!tpu.dma_semaphore, #tpu.memory_space<semaphore_mem>>
    tpu.wait_dma2 semaphore(%180 : memref<!tpu.dma_semaphore, #tpu.memory_space<semaphore_mem>>) src(%176 : memref<512xf32, #tpu.memory_space<any>>) dst(%178 : memref<512xf32, #tpu.memory_space<vmem>>)
    %c0_i32_94 = arith.constant 0 : i32
    %c6_i32_95 = arith.constant 6 : i32
    %c6_i32_96 = arith.constant 6 : i32
    %c0_i32_97 = arith.constant 0 : i32
    %181 = tpu.memref_slice %arg2[%c0_i32_94, %c0_i32_97] : memref<1024x512xf32, #tpu.memory_space<any>> -> memref<1x512xf32, #tpu.memory_space<any>>
    %182 = tpu.memref_squeeze %181 : memref<1x512xf32, #tpu.memory_space<any>> -> memref<512xf32, #tpu.memory_space<any>>
    %c0_i32_98 = arith.constant 0 : i32
    %183 = tpu.memref_slice %arg4[%c6_i32_95, %c0_i32_98] : memref<16x512xf32, #tpu.memory_space<vmem>> -> memref<1x512xf32, #tpu.memory_space<vmem>>
    %184 = tpu.memref_squeeze %183 : memref<1x512xf32, #tpu.memory_space<vmem>> -> memref<512xf32, #tpu.memory_space<vmem>>
    %185 = tpu.memref_slice %arg5[%c6_i32_96] : memref<16x!tpu.dma_semaphore, #tpu.memory_space<semaphore_mem>> -> memref<1x!tpu.dma_semaphore, #tpu.memory_space<semaphore_mem>>
    %186 = tpu.memref_squeeze %185 : memref<1x!tpu.dma_semaphore, #tpu.memory_space<semaphore_mem>> -> memref<!tpu.dma_semaphore, #tpu.memory_space<semaphore_mem>>
    tpu.wait_dma2 semaphore(%186 : memref<!tpu.dma_semaphore, #tpu.memory_space<semaphore_mem>>) src(%182 : memref<512xf32, #tpu.memory_space<any>>) dst(%184 : memref<512xf32, #tpu.memory_space<vmem>>)
    %c0_i32_99 = arith.constant 0 : i32
    %c7_i32_100 = arith.constant 7 : i32
    %c7_i32_101 = arith.constant 7 : i32
    %c0_i32_102 = arith.constant 0 : i32
    %187 = tpu.memref_slice %arg2[%c0_i32_99, %c0_i32_102] : memref<1024x512xf32, #tpu.memory_space<any>> -> memref<1x512xf32, #tpu.memory_space<any>>
    %188 = tpu.memref_squeeze %187 : memref<1x512xf32, #tpu.memory_space<any>> -> memref<512xf32, #tpu.memory_space<any>>
    %c0_i32_103 = arith.constant 0 : i32
    %189 = tpu.memref_slice %arg4[%c7_i32_100, %c0_i32_103] : memref<16x512xf32, #tpu.memory_space<vmem>> -> memref<1x512xf32, #tpu.memory_space<vmem>>
    %190 = tpu.memref_squeeze %189 : memref<1x512xf32, #tpu.memory_space<vmem>> -> memref<512xf32, #tpu.memory_space<vmem>>
    %191 = tpu.memref_slice %arg5[%c7_i32_101] : memref<16x!tpu.dma_semaphore, #tpu.memory_space<semaphore_mem>> -> memref<1x!tpu.dma_semaphore, #tpu.memory_space<semaphore_mem>>
    %192 = tpu.memref_squeeze %191 : memref<1x!tpu.dma_semaphore, #tpu.memory_space<semaphore_mem>> -> memref<!tpu.dma_semaphore, #tpu.memory_space<semaphore_mem>>
    tpu.wait_dma2 semaphore(%192 : memref<!tpu.dma_semaphore, #tpu.memory_space<semaphore_mem>>) src(%188 : memref<512xf32, #tpu.memory_space<any>>) dst(%190 : memref<512xf32, #tpu.memory_space<vmem>>)
    %c0_i32_104 = arith.constant 0 : i32
    %c8_i32_105 = arith.constant 8 : i32
    %c8_i32_106 = arith.constant 8 : i32
    %c0_i32_107 = arith.constant 0 : i32
    %193 = tpu.memref_slice %arg2[%c0_i32_104, %c0_i32_107] : memref<1024x512xf32, #tpu.memory_space<any>> -> memref<1x512xf32, #tpu.memory_space<any>>
    %194 = tpu.memref_squeeze %193 : memref<1x512xf32, #tpu.memory_space<any>> -> memref<512xf32, #tpu.memory_space<any>>
    %c0_i32_108 = arith.constant 0 : i32
    %195 = tpu.memref_slice %arg4[%c8_i32_105, %c0_i32_108] : memref<16x512xf32, #tpu.memory_space<vmem>> -> memref<1x512xf32, #tpu.memory_space<vmem>>
    %196 = tpu.memref_squeeze %195 : memref<1x512xf32, #tpu.memory_space<vmem>> -> memref<512xf32, #tpu.memory_space<vmem>>
    %197 = tpu.memref_slice %arg5[%c8_i32_106] : memref<16x!tpu.dma_semaphore, #tpu.memory_space<semaphore_mem>> -> memref<1x!tpu.dma_semaphore, #tpu.memory_space<semaphore_mem>>
    %198 = tpu.memref_squeeze %197 : memref<1x!tpu.dma_semaphore, #tpu.memory_space<semaphore_mem>> -> memref<!tpu.dma_semaphore, #tpu.memory_space<semaphore_mem>>
    tpu.wait_dma2 semaphore(%198 : memref<!tpu.dma_semaphore, #tpu.memory_space<semaphore_mem>>) src(%194 : memref<512xf32, #tpu.memory_space<any>>) dst(%196 : memref<512xf32, #tpu.memory_space<vmem>>)
    %c0_i32_109 = arith.constant 0 : i32
    %c9_i32_110 = arith.constant 9 : i32
    %c9_i32_111 = arith.constant 9 : i32
    %c0_i32_112 = arith.constant 0 : i32
    %199 = tpu.memref_slice %arg2[%c0_i32_109, %c0_i32_112] : memref<1024x512xf32, #tpu.memory_space<any>> -> memref<1x512xf32, #tpu.memory_space<any>>
    %200 = tpu.memref_squeeze %199 : memref<1x512xf32, #tpu.memory_space<any>> -> memref<512xf32, #tpu.memory_space<any>>
    %c0_i32_113 = arith.constant 0 : i32
    %201 = tpu.memref_slice %arg4[%c9_i32_110, %c0_i32_113] : memref<16x512xf32, #tpu.memory_space<vmem>> -> memref<1x512xf32, #tpu.memory_space<vmem>>
    %202 = tpu.memref_squeeze %201 : memref<1x512xf32, #tpu.memory_space<vmem>> -> memref<512xf32, #tpu.memory_space<vmem>>
    %203 = tpu.memref_slice %arg5[%c9_i32_111] : memref<16x!tpu.dma_semaphore, #tpu.memory_space<semaphore_mem>> -> memref<1x!tpu.dma_semaphore, #tpu.memory_space<semaphore_mem>>
    %204 = tpu.memref_squeeze %203 : memref<1x!tpu.dma_semaphore, #tpu.memory_space<semaphore_mem>> -> memref<!tpu.dma_semaphore, #tpu.memory_space<semaphore_mem>>
    tpu.wait_dma2 semaphore(%204 : memref<!tpu.dma_semaphore, #tpu.memory_space<semaphore_mem>>) src(%200 : memref<512xf32, #tpu.memory_space<any>>) dst(%202 : memref<512xf32, #tpu.memory_space<vmem>>)
    %c0_i32_114 = arith.constant 0 : i32
    %c10_i32_115 = arith.constant 10 : i32
    %c10_i32_116 = arith.constant 10 : i32
    %c0_i32_117 = arith.constant 0 : i32
    %205 = tpu.memref_slice %arg2[%c0_i32_114, %c0_i32_117] : memref<1024x512xf32, #tpu.memory_space<any>> -> memref<1x512xf32, #tpu.memory_space<any>>
    %206 = tpu.memref_squeeze %205 : memref<1x512xf32, #tpu.memory_space<any>> -> memref<512xf32, #tpu.memory_space<any>>
    %c0_i32_118 = arith.constant 0 : i32
    %207 = tpu.memref_slice %arg4[%c10_i32_115, %c0_i32_118] : memref<16x512xf32, #tpu.memory_space<vmem>> -> memref<1x512xf32, #tpu.memory_space<vmem>>
    %208 = tpu.memref_squeeze %207 : memref<1x512xf32, #tpu.memory_space<vmem>> -> memref<512xf32, #tpu.memory_space<vmem>>
    %209 = tpu.memref_slice %arg5[%c10_i32_116] : memref<16x!tpu.dma_semaphore, #tpu.memory_space<semaphore_mem>> -> memref<1x!tpu.dma_semaphore, #tpu.memory_space<semaphore_mem>>
    %210 = tpu.memref_squeeze %209 : memref<1x!tpu.dma_semaphore, #tpu.memory_space<semaphore_mem>> -> memref<!tpu.dma_semaphore, #tpu.memory_space<semaphore_mem>>
    tpu.wait_dma2 semaphore(%210 : memref<!tpu.dma_semaphore, #tpu.memory_space<semaphore_mem>>) src(%206 : memref<512xf32, #tpu.memory_space<any>>) dst(%208 : memref<512xf32, #tpu.memory_space<vmem>>)
    %c0_i32_119 = arith.constant 0 : i32
    %c11_i32_120 = arith.constant 11 : i32
    %c11_i32_121 = arith.constant 11 : i32
    %c0_i32_122 = arith.constant 0 : i32
    %211 = tpu.memref_slice %arg2[%c0_i32_119, %c0_i32_122] : memref<1024x512xf32, #tpu.memory_space<any>> -> memref<1x512xf32, #tpu.memory_space<any>>
    %212 = tpu.memref_squeeze %211 : memref<1x512xf32, #tpu.memory_space<any>> -> memref<512xf32, #tpu.memory_space<any>>
    %c0_i32_123 = arith.constant 0 : i32
    %213 = tpu.memref_slice %arg4[%c11_i32_120, %c0_i32_123] : memref<16x512xf32, #tpu.memory_space<vmem>> -> memref<1x512xf32, #tpu.memory_space<vmem>>
    %214 = tpu.memref_squeeze %213 : memref<1x512xf32, #tpu.memory_space<vmem>> -> memref<512xf32, #tpu.memory_space<vmem>>
    %215 = tpu.memref_slice %arg5[%c11_i32_121] : memref<16x!tpu.dma_semaphore, #tpu.memory_space<semaphore_mem>> -> memref<1x!tpu.dma_semaphore, #tpu.memory_space<semaphore_mem>>
    %216 = tpu.memref_squeeze %215 : memref<1x!tpu.dma_semaphore, #tpu.memory_space<semaphore_mem>> -> memref<!tpu.dma_semaphore, #tpu.memory_space<semaphore_mem>>
    tpu.wait_dma2 semaphore(%216 : memref<!tpu.dma_semaphore, #tpu.memory_space<semaphore_mem>>) src(%212 : memref<512xf32, #tpu.memory_space<any>>) dst(%214 : memref<512xf32, #tpu.memory_space<vmem>>)
    %c0_i32_124 = arith.constant 0 : i32
    %c12_i32_125 = arith.constant 12 : i32
    %c12_i32_126 = arith.constant 12 : i32
    %c0_i32_127 = arith.constant 0 : i32
    %217 = tpu.memref_slice %arg2[%c0_i32_124, %c0_i32_127] : memref<1024x512xf32, #tpu.memory_space<any>> -> memref<1x512xf32, #tpu.memory_space<any>>
    %218 = tpu.memref_squeeze %217 : memref<1x512xf32, #tpu.memory_space<any>> -> memref<512xf32, #tpu.memory_space<any>>
    %c0_i32_128 = arith.constant 0 : i32
    %219 = tpu.memref_slice %arg4[%c12_i32_125, %c0_i32_128] : memref<16x512xf32, #tpu.memory_space<vmem>> -> memref<1x512xf32, #tpu.memory_space<vmem>>
    %220 = tpu.memref_squeeze %219 : memref<1x512xf32, #tpu.memory_space<vmem>> -> memref<512xf32, #tpu.memory_space<vmem>>
    %221 = tpu.memref_slice %arg5[%c12_i32_126] : memref<16x!tpu.dma_semaphore, #tpu.memory_space<semaphore_mem>> -> memref<1x!tpu.dma_semaphore, #tpu.memory_space<semaphore_mem>>
    %222 = tpu.memref_squeeze %221 : memref<1x!tpu.dma_semaphore, #tpu.memory_space<semaphore_mem>> -> memref<!tpu.dma_semaphore, #tpu.memory_space<semaphore_mem>>
    tpu.wait_dma2 semaphore(%222 : memref<!tpu.dma_semaphore, #tpu.memory_space<semaphore_mem>>) src(%218 : memref<512xf32, #tpu.memory_space<any>>) dst(%220 : memref<512xf32, #tpu.memory_space<vmem>>)
    %c0_i32_129 = arith.constant 0 : i32
    %c13_i32_130 = arith.constant 13 : i32
    %c13_i32_131 = arith.constant 13 : i32
    %c0_i32_132 = arith.constant 0 : i32
    %223 = tpu.memref_slice %arg2[%c0_i32_129, %c0_i32_132] : memref<1024x512xf32, #tpu.memory_space<any>> -> memref<1x512xf32, #tpu.memory_space<any>>
    %224 = tpu.memref_squeeze %223 : memref<1x512xf32, #tpu.memory_space<any>> -> memref<512xf32, #tpu.memory_space<any>>
    %c0_i32_133 = arith.constant 0 : i32
    %225 = tpu.memref_slice %arg4[%c13_i32_130, %c0_i32_133] : memref<16x512xf32, #tpu.memory_space<vmem>> -> memref<1x512xf32, #tpu.memory_space<vmem>>
    %226 = tpu.memref_squeeze %225 : memref<1x512xf32, #tpu.memory_space<vmem>> -> memref<512xf32, #tpu.memory_space<vmem>>
    %227 = tpu.memref_slice %arg5[%c13_i32_131] : memref<16x!tpu.dma_semaphore, #tpu.memory_space<semaphore_mem>> -> memref<1x!tpu.dma_semaphore, #tpu.memory_space<semaphore_mem>>
    %228 = tpu.memref_squeeze %227 : memref<1x!tpu.dma_semaphore, #tpu.memory_space<semaphore_mem>> -> memref<!tpu.dma_semaphore, #tpu.memory_space<semaphore_mem>>
    tpu.wait_dma2 semaphore(%228 : memref<!tpu.dma_semaphore, #tpu.memory_space<semaphore_mem>>) src(%224 : memref<512xf32, #tpu.memory_space<any>>) dst(%226 : memref<512xf32, #tpu.memory_space<vmem>>)
    %c0_i32_134 = arith.constant 0 : i32
    %c14_i32_135 = arith.constant 14 : i32
    %c14_i32_136 = arith.constant 14 : i32
    %c0_i32_137 = arith.constant 0 : i32
    %229 = tpu.memref_slice %arg2[%c0_i32_134, %c0_i32_137] : memref<1024x512xf32, #tpu.memory_space<any>> -> memref<1x512xf32, #tpu.memory_space<any>>
    %230 = tpu.memref_squeeze %229 : memref<1x512xf32, #tpu.memory_space<any>> -> memref<512xf32, #tpu.memory_space<any>>
    %c0_i32_138 = arith.constant 0 : i32
    %231 = tpu.memref_slice %arg4[%c14_i32_135, %c0_i32_138] : memref<16x512xf32, #tpu.memory_space<vmem>> -> memref<1x512xf32, #tpu.memory_space<vmem>>
    %232 = tpu.memref_squeeze %231 : memref<1x512xf32, #tpu.memory_space<vmem>> -> memref<512xf32, #tpu.memory_space<vmem>>
    %233 = tpu.memref_slice %arg5[%c14_i32_136] : memref<16x!tpu.dma_semaphore, #tpu.memory_space<semaphore_mem>> -> memref<1x!tpu.dma_semaphore, #tpu.memory_space<semaphore_mem>>
    %234 = tpu.memref_squeeze %233 : memref<1x!tpu.dma_semaphore, #tpu.memory_space<semaphore_mem>> -> memref<!tpu.dma_semaphore, #tpu.memory_space<semaphore_mem>>
    tpu.wait_dma2 semaphore(%234 : memref<!tpu.dma_semaphore, #tpu.memory_space<semaphore_mem>>) src(%230 : memref<512xf32, #tpu.memory_space<any>>) dst(%232 : memref<512xf32, #tpu.memory_space<vmem>>)
    %c0_i32_139 = arith.constant 0 : i32
    %c15_i32_140 = arith.constant 15 : i32
    %c15_i32_141 = arith.constant 15 : i32
    %c0_i32_142 = arith.constant 0 : i32
    %235 = tpu.memref_slice %arg2[%c0_i32_139, %c0_i32_142] : memref<1024x512xf32, #tpu.memory_space<any>> -> memref<1x512xf32, #tpu.memory_space<any>>
    %236 = tpu.memref_squeeze %235 : memref<1x512xf32, #tpu.memory_space<any>> -> memref<512xf32, #tpu.memory_space<any>>
    %c0_i32_143 = arith.constant 0 : i32
    %237 = tpu.memref_slice %arg4[%c15_i32_140, %c0_i32_143] : memref<16x512xf32, #tpu.memory_space<vmem>> -> memref<1x512xf32, #tpu.memory_space<vmem>>
    %238 = tpu.memref_squeeze %237 : memref<1x512xf32, #tpu.memory_space<vmem>> -> memref<512xf32, #tpu.memory_space<vmem>>
    %239 = tpu.memref_slice %arg5[%c15_i32_141] : memref<16x!tpu.dma_semaphore, #tpu.memory_space<semaphore_mem>> -> memref<1x!tpu.dma_semaphore, #tpu.memory_space<semaphore_mem>>
    %240 = tpu.memref_squeeze %239 : memref<1x!tpu.dma_semaphore, #tpu.memory_space<semaphore_mem>> -> memref<!tpu.dma_semaphore, #tpu.memory_space<semaphore_mem>>
    tpu.wait_dma2 semaphore(%240 : memref<!tpu.dma_semaphore, #tpu.memory_space<semaphore_mem>>) src(%236 : memref<512xf32, #tpu.memory_space<any>>) dst(%238 : memref<512xf32, #tpu.memory_space<vmem>>)
    %c0 = arith.constant 0 : index
    %c0_144 = arith.constant 0 : index
    %241 = vector.load %arg4[%c0, %c0_144] : memref<16x512xf32, #tpu.memory_space<vmem>>, vector<16x512xf32>
    %cst = arith.constant 22.6274166 : f32
    %242 = vector.broadcast %cst : f32 to vector<16x512xf32>
    %243 = arith.mulf %241, %242 : vector<16x512xf32>
    %c0_145 = arith.constant 0 : index
    %c0_146 = arith.constant 0 : index
    %244 = vector.load %arg3[%c0_145, %c0_146] : memref<16x512xf32, #tpu.memory_space<vmem>>, vector<16x512xf32>
    tpu.vector_store %arg3[%c0_145, %c0_146], %243 {strides = array<i32>} : memref<16x512xf32, #tpu.memory_space<vmem>>, vector<16x512xf32>,
    return
  }
  func.func @transform_1(%arg0: i32, %arg1: memref<16xi32, #tpu.memory_space<smem>>) -> (i32, i32) {
    %c0_i32 = arith.constant 0 : i32
    %c0_i32_0 = arith.constant 0 : i32
    return %arg0, %c0_i32 : i32, i32
  }
}

</mosaic_0001>

<llo_original>
// kernel: tpu_custom_call.1
$region0: #{tpu_custom_call.1}
  #allocation0 [shape = 'u32[]', space=smem, size = 0x4, offset = 0x4, fixed_abs, tag = 'smem constant byte address 0x4 - core index']
  #allocation1 [shape = 'u32[144,128]{1,0:T(1,128)}', space=vmem, size = 0x12000, scoped, tag = 'internal scratch']
  #allocation2 [shape = 'f32[16,512]{1,0:T(8,128)}', space=vmem, size = 0x8000, scoped, tag = 'scratch operand']
  #allocation3 [shape = 's32[16]{0}', space=sflag, size = 0x40, scoped, tag = 'scratch operand']
  #allocation4 [shape = 's32[1]{0}', space=sflag, size = 0x4, scoped, tag = 'scoped memory for tpu_custom_call.1']
  #allocation5 [shape = 'u8[512]{0}', space=smem, size = 0x200, scoped, tag = 'prefetched SMEM operand 0']
  #allocation8 [shape = 's32[]', space=sflag, size = 0x4, offset = 0, fixed_abs, tag = 'sflag constant byte address 0x0 - dummy sync flag']
  #allocation9 [shape = 's32[]', space=sflag, size = 0x4, offset = 0, fixed_abs, tag = 'sflag constant byte address 0x0 - dummy sync flag']
  #allocation10 [shape = 's32[]', space=sflag, size = 0x4, offset = 0, fixed_abs, tag = 'sflag constant byte address 0x0 - dummy sync flag']
  #allocation11 [shape = 's32[]', space=sflag, size = 0x4, offset = 0, fixed_abs, tag = 'sflag constant byte address 0x0 - dummy sync flag']
  #allocation12 [shape = 's32[]', space=sflag, size = 0x4, offset = 0, fixed_abs, tag = 'sflag constant byte address 0x0 - dummy sync flag']
  #allocation13 [shape = 's32[]', space=sflag, size = 0x4, offset = 0, fixed_abs, tag = 'sflag constant byte address 0x0 - dummy sync flag']
  #allocation14 [shape = 's32[]', space=sflag, size = 0x4, offset = 0, fixed_abs, tag = 'sflag constant byte address 0x0 - dummy sync flag']
  #allocation15 [shape = 's32[]', space=sflag, size = 0x4, offset = 0, fixed_abs, tag = 'sflag constant byte address 0x0 - dummy sync flag']
  #allocation16 [shape = 's32[]', space=sflag, size = 0x4, offset = 0, fixed_abs, tag = 'sflag constant byte address 0x0 - dummy sync flag']
  #allocation17 [shape = 's32[]', space=sflag, size = 0x4, offset = 0, fixed_abs, tag = 'sflag constant byte address 0x0 - dummy sync flag']
  #allocation18 [shape = 's32[]', space=sflag, size = 0x4, offset = 0, fixed_abs, tag = 'sflag constant byte address 0x0 - dummy sync flag']
  #allocation19 [shape = 's32[]', space=sflag, size = 0x4, offset = 0, fixed_abs, tag = 'sflag constant byte address 0x0 - dummy sync flag']
  #allocation20 [shape = 's32[]', space=sflag, size = 0x4, offset = 0, fixed_abs, tag = 'sflag constant byte address 0x0 - dummy sync flag']
  #allocation21 [shape = 's32[]', space=sflag, size = 0x4, offset = 0, fixed_abs, tag = 'sflag constant byte address 0x0 - dummy sync flag']
  #allocation22 [shape = 's32[]', space=sflag, size = 0x4, offset = 0, fixed_abs, tag = 'sflag constant byte address 0x0 - dummy sync flag']
  #allocation23 [shape = 's32[]', space=sflag, size = 0x4, offset = 0, fixed_abs, tag = 'sflag constant byte address 0x0 - dummy sync flag']
  %s0 = inlined_call_operand.hbm [shape: s32[16], index: 0, kind: input, shape index: {}]
  %s1 = inlined_call_operand.hbm [shape: f32[1024,512], index: 1, kind: input, shape index: {}]
  %s2 = inlined_call_operand.hbm [shape: f32[16,512], index: 2, kind: output, shape index: {}]
  %s3 = sld [smem:[#allocation0]]
  $region10: #{tpu_custom_call.1} parent=0
    _
  %s5 = ssub.s32 1, %s3
  %s6 = scalar_select 0, %s5, %s3
  %8 = dma.hbm_to_smem %s0, 16, [#allocation5], [#allocation4]
  %9 = dma.done [#allocation4], 16
  %10 = sfence
  $region1: #{tpu_custom_call.1} parent=0
    #allocation6 [shape = 'u8[32768]{0}', space=vmem, size = 0x8000, scoped, tag = 'output window, operand 0, single buffered']
    #allocation7 [shape = 's32[1]{0}', space=sflag, size = 0x4, scoped, tag = 'scoped memory for tpu_custom_call.1']
    %11 = vsyncpa [#allocation7], 0
    %s12 = smul.u32 0, 16
    %s13 = sld [smem:[#allocation5 + %s12]]
    %s14 = sshrl.u32 %s13, 3
    %s15 = sand.u32 %s13, 7
    %s16 = smul.u32 %s14, 32
    %s17 = sadd.s32 %s15, %s16
    %s18 = smul.addr %s17, 16
    %s19 = scalar_lea.hbm %s1, %s18
    %s21 = sshll.u32 [#allocation2], 4
    %s22 = int_to_ptr.vmem [resolvable:$true] %s21
    %24 = dma.hbm_to_vmem [thread:$0]  %s19, 64, %s22, [#allocation3], 128, 128, 1
    %s25 = sadd.s32 %s12, 1
    %s26 = sld [smem:[#allocation5 + %s25]]
    %s27 = sshrl.u32 %s26, 3
    %s28 = sand.u32 %s26, 7
    %s29 = smul.u32 %s27, 32
    %s30 = sadd.s32 %s28, %s29
    %s31 = smul.addr %s30, 16
    %s32 = scalar_lea.hbm %s1, %s31
    %s33 = scalar_lea.vmem [#allocation2], 1
    %s34 = scalar_lea.sflag [#allocation3], 1
    %s36 = sshll.u32 %s33, 4
    %s37 = int_to_ptr.vmem [resolvable:$true] %s36
    %39 = dma.hbm_to_vmem [thread:$0]  %s32, 64, %s37, %s34, 128, 128, 1
    %s40 = sadd.s32 %s12, 2
    %s41 = sld [smem:[#allocation5 + %s40]]
    %s42 = sshrl.u32 %s41, 3
    %s43 = sand.u32 %s41, 7
    %s44 = smul.u32 %s42, 32
    %s45 = sadd.s32 %s43, %s44
    %s46 = smul.addr %s45, 16
    %s47 = scalar_lea.hbm %s1, %s46
    %s48 = scalar_lea.vmem [#allocation2], 2
    %s49 = scalar_lea.sflag [#allocation3], 2
    %s51 = sshll.u32 %s48, 4
    %s52 = int_to_ptr.vmem [resolvable:$true] %s51
    %54 = dma.hbm_to_vmem [thread:$0]  %s47, 64, %s52, %s49, 128, 128, 1
    %s55 = sadd.s32 %s12, 3
    %s56 = sld [smem:[#allocation5 + %s55]]
    %s57 = sshrl.u32 %s56, 3
    %s58 = sand.u32 %s56, 7
    %s59 = smul.u32 %s57, 32
    %s60 = sadd.s32 %s58, %s59
    %s61 = smul.addr %s60, 16
    %s62 = scalar_lea.hbm %s1, %s61
    %s63 = scalar_lea.vmem [#allocation2], 3
    %s64 = scalar_lea.sflag [#allocation3], 3
    %s66 = sshll.u32 %s63, 4
    %s67 = int_to_ptr.vmem [resolvable:$true] %s66
    %69 = dma.hbm_to_vmem [thread:$0]  %s62, 64, %s67, %s64, 128, 128, 1
    %s70 = sadd.s32 %s12, 4
    %s71 = sld [smem:[#allocation5 + %s70]]
    %s72 = sshrl.u32 %s71, 3
    %s73 = sand.u32 %s71, 7
    %s74 = smul.u32 %s72, 32
    %s75 = sadd.s32 %s73, %s74
    %s76 = smul.addr %s75, 16
    %s77 = scalar_lea.hbm %s1, %s76
    %s78 = scalar_lea.vmem [#allocation2], 4
    %s79 = scalar_lea.sflag [#allocation3], 4
    %s81 = sshll.u32 %s78, 4
    %s82 = int_to_ptr.vmem [resolvable:$true] %s81
    %84 = dma.hbm_to_vmem [thread:$0]  %s77, 64, %s82, %s79, 128, 128, 1
    %s85 = sadd.s32 %s12, 5
    %s86 = sld [smem:[#allocation5 + %s85]]
    %s87 = sshrl.u32 %s86, 3
    %s88 = sand.u32 %s86, 7
    %s89 = smul.u32 %s87, 32
    %s90 = sadd.s32 %s88, %s89
    %s91 = smul.addr %s90, 16
    %s92 = scalar_lea.hbm %s1, %s91
    %s93 = scalar_lea.vmem [#allocation2], 5
    %s94 = scalar_lea.sflag [#allocation3], 5
    %s96 = sshll.u32 %s93, 4
    %s97 = int_to_ptr.vmem [resolvable:$true] %s96
    %99 = dma.hbm_to_vmem [thread:$0]  %s92, 64, %s97, %s94, 128, 128, 1
    %s100 = sadd.s32 %s12, 6
    %s101 = sld [smem:[#allocation5 + %s100]]
    %s102 = sshrl.u32 %s101, 3
    %s103 = sand.u32 %s101, 7
    %s104 = smul.u32 %s102, 32
    %s105 = sadd.s32 %s103, %s104
    %s106 = smul.addr %s105, 16
    %s107 = scalar_lea.hbm %s1, %s106
    %s108 = scalar_lea.vmem [#allocation2], 6
    %s109 = scalar_lea.sflag [#allocation3], 6
    %s111 = sshll.u32 %s108, 4
    %s112 = int_to_ptr.vmem [resolvable:$true] %s111
    %114 = dma.hbm_to_vmem [thread:$0]  %s107, 64, %s112, %s109, 128, 128, 1
    %s115 = sadd.s32 %s12, 7
    %s116 = sld [smem:[#allocation5 + %s115]]
    %s117 = sshrl.u32 %s116, 3
    %s118 = sand.u32 %s116, 7
    %s119 = smul.u32 %s117, 32
    %s120 = sadd.s32 %s118, %s119
    %s121 = smul.addr %s120, 16
    %s122 = scalar_lea.hbm %s1, %s121
    %s123 = scalar_lea.vmem [#allocation2], 7
    %s124 = scalar_lea.sflag [#allocation3], 7
    %s126 = sshll.u32 %s123, 4
    %s127 = int_to_ptr.vmem [resolvable:$true] %s126
    %129 = dma.hbm_to_vmem [thread:$0]  %s122, 64, %s127, %s124, 128, 128, 1
    %s130 = sadd.s32 %s12, 8
    %s131 = sld [smem:[#allocation5 + %s130]]
    %s132 = sshrl.u32 %s131, 3
    %s133 = sand.u32 %s131, 7
    %s134 = smul.u32 %s132, 32
    %s135 = sadd.s32 %s133, %s134
    %s136 = smul.addr %s135, 16
    %s137 = scalar_lea.hbm %s1, %s136
    %s138 = scalar_lea.vmem [#allocation2], 32
    %s139 = scalar_lea.sflag [#allocation3], 8
    %s141 = sshll.u32 %s138, 4
    %s142 = int_to_ptr.vmem [resolvable:$true] %s141
    %144 = dma.hbm_to_vmem [thread:$0]  %s137, 64, %s142, %s139, 128, 128, 1
    %s145 = sadd.s32 %s12, 9
    %s146 = sld [smem:[#allocation5 + %s145]]
    %s147 = sshrl.u32 %s146, 3
    %s148 = sand.u32 %s146, 7
    %s149 = smul.u32 %s147, 32
    %s150 = sadd.s32 %s148, %s149
    %s151 = smul.addr %s150, 16
    %s152 = scalar_lea.hbm %s1, %s151
    %s153 = scalar_lea.vmem [#allocation2], 33
    %s154 = scalar_lea.sflag [#allocation3], 9
    %s156 = sshll.u32 %s153, 4
    %s157 = int_to_ptr.vmem [resolvable:$true] %s156
    %159 = dma.hbm_to_vmem [thread:$0]  %s152, 64, %s157, %s154, 128, 128, 1
    %s160 = sadd.s32 %s12, 10
    %s161 = sld [smem:[#allocation5 + %s160]]
    %s162 = sshrl.u32 %s161, 3
    %s163 = sand.u32 %s161, 7
    %s164 = smul.u32 %s162, 32
    %s165 = sadd.s32 %s163, %s164
    %s166 = smul.addr %s165, 16
    %s167 = scalar_lea.hbm %s1, %s166
    %s168 = scalar_lea.vmem [#allocation2], 34
    %s169 = scalar_lea.sflag [#allocation3], 10
    %s171 = sshll.u32 %s168, 4
    %s172 = int_to_ptr.vmem [resolvable:$true] %s171
    %174 = dma.hbm_to_vmem [thread:$0]  %s167, 64, %s172, %s169, 128, 128, 1
    %s175 = sadd.s32 %s12, 11
    %s176 = sld [smem:[#allocation5 + %s175]]
    %s177 = sshrl.u32 %s176, 3
    %s178 = sand.u32 %s176, 7
    %s179 = smul.u32 %s177, 32
    %s180 = sadd.s32 %s178, %s179
    %s181 = smul.addr %s180, 16
    %s182 = scalar_lea.hbm %s1, %s181
    %s183 = scalar_lea.vmem [#allocation2], 35
    %s184 = scalar_lea.sflag [#allocation3], 11
    %s186 = sshll.u32 %s183, 4
    %s187 = int_to_ptr.vmem [resolvable:$true] %s186
    %189 = dma.hbm_to_vmem [thread:$0]  %s182, 64, %s187, %s184, 128, 128, 1
    %s190 = sadd.s32 %s12, 12
    %s191 = sld [smem:[#allocation5 + %s190]]
    %s192 = sshrl.u32 %s191, 3
    %s193 = sand.u32 %s191, 7
    %s194 = smul.u32 %s192, 32
    %s195 = sadd.s32 %s193, %s194
    %s196 = smul.addr %s195, 16
    %s197 = scalar_lea.hbm %s1, %s196
    %s198 = scalar_lea.vmem [#allocation2], 36
    %s199 = scalar_lea.sflag [#allocation3], 12
    %s201 = sshll.u32 %s198, 4
    %s202 = int_to_ptr.vmem [resolvable:$true] %s201
    %204 = dma.hbm_to_vmem [thread:$0]  %s197, 64, %s202, %s199, 128, 128, 1
    %s205 = sadd.s32 %s12, 13
    %s206 = sld [smem:[#allocation5 + %s205]]
    %s207 = sshrl.u32 %s206, 3
    %s208 = sand.u32 %s206, 7
    %s209 = smul.u32 %s207, 32
    %s210 = sadd.s32 %s208, %s209
    %s211 = smul.addr %s210, 16
    %s212 = scalar_lea.hbm %s1, %s211
    %s213 = scalar_lea.vmem [#allocation2], 37
    %s214 = scalar_lea.sflag [#allocation3], 13
    %s216 = sshll.u32 %s213, 4
    %s217 = int_to_ptr.vmem [resolvable:$true] %s216
    %219 = dma.hbm_to_vmem [thread:$0]  %s212, 64, %s217, %s214, 128, 128, 1
    %s220 = sadd.s32 %s12, 14
    %s221 = sld [smem:[#allocation5 + %s220]]
    %s222 = sshrl.u32 %s221, 3
    %s223 = sand.u32 %s221, 7
    %s224 = smul.u32 %s222, 32
    %s225 = sadd.s32 %s223, %s224
    %s226 = smul.addr %s225, 16
    %s227 = scalar_lea.hbm %s1, %s226
    %s228 = scalar_lea.vmem [#allocation2], 38
    %s229 = scalar_lea.sflag [#allocation3], 14
    %s231 = sshll.u32 %s228, 4
    %s232 = int_to_ptr.vmem [resolvable:$true] %s231
    %234 = dma.hbm_to_vmem [thread:$0]  %s227, 64, %s232, %s229, 128, 128, 1
    %s235 = sadd.s32 %s12, 15
    %s236 = sld [smem:[#allocation5 + %s235]]
    %s237 = sshrl.u32 %s236, 3
    %s238 = sand.u32 %s236, 7
    %s239 = smul.u32 %s237, 32
    %s240 = sadd.s32 %s238, %s239
    %s241 = smul.addr %s240, 16
    %s242 = scalar_lea.hbm %s1, %s241
    %s243 = scalar_lea.vmem [#allocation2], 39
    %s244 = scalar_lea.sflag [#allocation3], 15
    %s246 = sshll.u32 %s243, 4
    %s247 = int_to_ptr.vmem [resolvable:$true] %s246
    %249 = dma.hbm_to_vmem [thread:$0]  %s242, 64, %s247, %s244, 128, 128, 1
    %251 = dma.done [#allocation3], 64
    %253 = dma.done %s34, 64
    %255 = dma.done %s49, 64
    %257 = dma.done %s64, 64
    %259 = dma.done %s79, 64
    %261 = dma.done %s94, 64
    %263 = dma.done %s109, 64
    %265 = dma.done %s124, 64
    %267 = dma.done %s139, 64
    %269 = dma.done %s154, 64
    %271 = dma.done %s169, 64
    %273 = dma.done %s184, 64
    %275 = dma.done %s199, 64
    %277 = dma.done %s214, 64
    %279 = dma.done %s229, 64
    %281 = dma.done %s244, 64
    %v282 = vld [vmem:[#allocation2] sm:$0xff]
    %v283 = vld [vmem:[#allocation2 + $0x8] sm:$0xff]
    %v284 = vld [vmem:[#allocation2 + $0x10] sm:$0xff]
    %v285 = vld [vmem:[#allocation2 + $0x18] sm:$0xff]
    %v286 = vld [vmem:[#allocation2 + $0x20] sm:$0xff]
    %v287 = vld [vmem:[#allocation2 + $0x28] sm:$0xff]
    %v288 = vld [vmem:[#allocation2 + $0x30] sm:$0xff]
    %v289 = vld [vmem:[#allocation2 + $0x38] sm:$0xff]
    %v290 = vmul.f32 %v282, 22.627417
    %v291 = vmul.f32 %v283, 22.627417
    %v292 = vmul.f32 %v284, 22.627417
    %v293 = vmul.f32 %v285, 22.627417
    %v294 = vmul.f32 %v286, 22.627417
    %v295 = vmul.f32 %v287, 22.627417
    %v296 = vmul.f32 %v288, 22.627417
    %v297 = vmul.f32 %v289, 22.627417
    %298 = vst [vmem:[#allocation6] sm:$0xff] %v290
    %299 = vst [vmem:[#allocation6 + $0x8] sm:$0xff] %v291
    %300 = vst [vmem:[#allocation6 + $0x10] sm:$0xff] %v292
    %301 = vst [vmem:[#allocation6 + $0x18] sm:$0xff] %v293
    %302 = vst [vmem:[#allocation6 + $0x20] sm:$0xff] %v294
    %303 = vst [vmem:[#allocation6 + $0x28] sm:$0xff] %v295
    %304 = vst [vmem:[#allocation6 + $0x30] sm:$0xff] %v296
    %305 = vst [vmem:[#allocation6 + $0x38] sm:$0xff] %v297
    // Predicated region
    $region2: #{tpu_custom_call.1} parent=1 // pred_check
      _
    $region3: #{tpu_custom_call.1} parent=1 // pred_check_branch
      %307 = sbr.rel (0) target = $region5
    $region4: #{tpu_custom_call.1} parent=1 // pred_region
      %s309 = ssub.s32 1024, 1024
      %310 = vsyncadd [#allocation7], %s309
      %s311 = sshll.u32 [#allocation6], 4
      %s312 = int_to_ptr.vmem [resolvable:$true] %s311
      %317 = dma.vmem_to_hbm [thread:$0]  %s312, 1024, %s2, [#allocation7], 512, 512, 32
    $region5: #{tpu_custom_call.1} parent=1 // pred_fallthru
      _
    // Predicated region
    $region6: #{tpu_custom_call.1} parent=1 // pred_check
      _
    $region7: #{tpu_custom_call.1} parent=1 // pred_check_branch
      %319 = sbr.rel (0) target = $region9
    $region8: #{tpu_custom_call.1} parent=1 // pred_region
      %320 = dma.done [#allocation7], 1024
    $region9: #{tpu_custom_call.1} parent=1 // pred_fallthru
      _
    %321 = vsyncpa [#allocation7], 1
  %322 = vsyncmov [#allocation3]
  %s323 = vpop.sfrf %322
  %p324 = scmp.eq.s32.totalorder %s323, 0
  %p325 = pneg %p324
  %327 = shalt.err (%p325)
  %s328 = scalar_lea.sflag [#allocation3], 1
  %329 = vsyncmov %s328
  %s330 = vpop.sfrf %329
  %p331 = scmp.eq.s32.totalorder %s330, 0
  %p332 = pneg %p331
  %334 = shalt.err (%p332)
  %s335 = scalar_lea.sflag [#allocation3], 2
  %336 = vsyncmov %s335
  %s337 = vpop.sfrf %336
  %p338 = scmp.eq.s32.totalorder %s337, 0
  %p339 = pneg %p338
  %341 = shalt.err (%p339)
  %s342 = scalar_lea.sflag [#allocation3], 3
  %343 = vsyncmov %s342
  %s344 = vpop.sfrf %343
  %p345 = scmp.eq.s32.totalorder %s344, 0
  %p346 = pneg %p345
  %348 = shalt.err (%p346)
  %s349 = scalar_lea.sflag [#allocation3], 4
  %350 = vsyncmov %s349
  %s351 = vpop.sfrf %350
  %p352 = scmp.eq.s32.totalorder %s351, 0
  %p353 = pneg %p352
  %355 = shalt.err (%p353)
  %s356 = scalar_lea.sflag [#allocation3], 5
  %357 = vsyncmov %s356
  %s358 = vpop.sfrf %357
  %p359 = scmp.eq.s32.totalorder %s358, 0
  %p360 = pneg %p359
  %362 = shalt.err (%p360)
  %s363 = scalar_lea.sflag [#allocation3], 6
  %364 = vsyncmov %s363
  %s365 = vpop.sfrf %364
  %p366 = scmp.eq.s32.totalorder %s365, 0
  %p367 = pneg %p366
  %369 = shalt.err (%p367)
  %s370 = scalar_lea.sflag [#allocation3], 7
  %371 = vsyncmov %s370
  %s372 = vpop.sfrf %371
  %p373 = scmp.eq.s32.totalorder %s372, 0
  %p374 = pneg %p373
  %376 = shalt.err (%p374)
  %s377 = scalar_lea.sflag [#allocation3], 8
  %378 = vsyncmov %s377
  %s379 = vpop.sfrf %378
  %p380 = scmp.eq.s32.totalorder %s379, 0
  %p381 = pneg %p380
  %383 = shalt.err (%p381)
  %s384 = scalar_lea.sflag [#allocation3], 9
  %385 = vsyncmov %s384
  %s386 = vpop.sfrf %385
  %p387 = scmp.eq.s32.totalorder %s386, 0
  %p388 = pneg %p387
  %390 = shalt.err (%p388)
  %s391 = scalar_lea.sflag [#allocation3], 10
  %392 = vsyncmov %s391
  %s393 = vpop.sfrf %392
  %p394 = scmp.eq.s32.totalorder %s393, 0
  %p395 = pneg %p394
  %397 = shalt.err (%p395)
  %s398 = scalar_lea.sflag [#allocation3], 11
  %399 = vsyncmov %s398
  %s400 = vpop.sfrf %399
  %p401 = scmp.eq.s32.totalorder %s400, 0
  %p402 = pneg %p401
  %404 = shalt.err (%p402)
  %s405 = scalar_lea.sflag [#allocation3], 12
  %406 = vsyncmov %s405
  %s407 = vpop.sfrf %406
  %p408 = scmp.eq.s32.totalorder %s407, 0
  %p409 = pneg %p408
  %411 = shalt.err (%p409)
  %s412 = scalar_lea.sflag [#allocation3], 13
  %413 = vsyncmov %s412
  %s414 = vpop.sfrf %413
  %p415 = scmp.eq.s32.totalorder %s414, 0
  %p416 = pneg %p415
  %418 = shalt.err (%p416)
  %s419 = scalar_lea.sflag [#allocation3], 14
  %420 = vsyncmov %s419
  %s421 = vpop.sfrf %420
  %p422 = scmp.eq.s32.totalorder %s421, 0
  %p423 = pneg %p422
  %425 = shalt.err (%p423)
  %s426 = scalar_lea.sflag [#allocation3], 15
  %427 = vsyncmov %s426
  %s428 = vpop.sfrf %427
  %p429 = scmp.eq.s32.totalorder %s428, 0
  %p430 = pneg %p429
  %432 = shalt.err (%p430)

</llo_original>
